<compile_context>
chip_gen: v5e
topology: v5e:2x2
jax: 0.10.0
libtpu: 0.0.40
codegen_flags: <defaults>
</compile_context>

<pallas_src>
import functools

import jax
import jax.numpy as jnp
from jax import lax
from jax.experimental import pallas as pl
from jax.experimental.pallas import tpu as pltpu

_MASK_VAL = -1e30  # effectively -inf for f32 softmax masking


def badanau_attn_kernel(rep_ref, q_ref, wh_ref, we_ref, wms_ref, out_ref, *,
                        valid_s, ew_dtype):
    TB, S_pad, D = rep_ref.shape

    # S_pad is a multiple of 8, so merging (TB, S_pad) onto the sublane axis is
    # a free relayout: one big-M MXU matmul instead of TB tiny ones.
    rep = rep_ref[...].reshape(TB * S_pad, D)
    q = q_ref[...]            # (TB, D)
    wh = wh_ref[...]          # (D, D)  PyTorch (out, in) layout
    we = we_ref[...]          # (D, D)  PyTorch (out, in) layout
    wms = wms_ref[...]        # (1, D)  f32

    # x @ W.T, consuming the (out, in) weight layout directly (no transpose).
    dn = (((1,), (1,)), ((), ()))
    h = lax.dot_general(rep, wh, dn, preferred_element_type=jnp.float32)  # (TB*S_pad, D)
    e = lax.dot_general(q, we, dn, preferred_element_type=jnp.float32)    # (TB, D)

    # tanh(W_h(rep) + W_e(q)): EUP tanh + VPU add, optionally bf16 (v6e/v7x).
    x = jnp.tanh((h.reshape(TB, S_pad, D) + e[:, None, :]).astype(ew_dtype))

    # w_ms(x): N=1 projection kept off the MXU -> broadcast multiply (VPU) +
    # lane reduction (XLU), accumulated in f32.
    score = jnp.sum(x.astype(jnp.float32) * wms, axis=-1)                 # (TB, S_pad)

    # Mask padded sequence columns so they cannot inflate the softmax denom.
    col = lax.broadcasted_iota(jnp.int32, (TB, S_pad), 1)
    score = jnp.where(col < valid_s, score, jnp.float32(_MASK_VAL))

    # Numerically stable softmax over S (torch dim=1), f32 throughout.
    m = jnp.max(score, axis=-1, keepdims=True)
    p = jnp.exp(score - m)
    denom = jnp.sum(p, axis=-1, keepdims=True)
    inv = pl.reciprocal(denom, approx=False)  # EUP; approx=False for bit-closeness
    out_ref[...] = (p * inv).astype(out_ref.dtype)


def _round_up(x, m):
    return ((x + m - 1) // m) * m


def _pick_batch_tile(B, per_row_bytes, budget_bytes, min_grid_steps):
    """Largest batch tile whose live activations fit the budget. TB sits on the
    sublane axis of the q/out blocks, so it must be a multiple of 8 unless it
    equals the (possibly padded) full batch; the wrapper pads B if TB does not
    divide it, so the old blow-the-budget fallback is gone."""
    cap = max(1, budget_bytes // max(per_row_bytes, 1))
    cap = min(cap, max(1, B // min_grid_steps))
    if cap >= B:
        return B
    tb = (cap // 8) * 8
    return max(tb, min(8, B))


def badanau_attn(query_pool, rep_out, W_h, W_e, w_ms, *,
                 mm_dtype=jnp.float32, ew_dtype=jnp.float32):
    """Forward pass of BadanauAttn; returns softmax weights of shape (B, S, 1).

    W_h, W_e: (D, D) PyTorch-style (out, in); w_ms: (1, D).
    mm_dtype=bf16 halves HBM traffic everywhere and uses the bf16 MXU path
    (f32 accumulate); ew_dtype=bf16 speeds the tanh/score path on v6e/v7x
    (keep f32 on v5e). Demo uses f32/f32 to match PyTorch within 1e-5.
    For tiny one-grid-step shapes XLA's fused ops are as fast; this kernel
    targets shapes where TB*S*D fills at least a few vregs.
    """
    B, S, D = rep_out.shape
    f32 = jnp.float32
    mm_bytes = jnp.dtype(mm_dtype).itemsize
    ew_bytes = jnp.dtype(ew_dtype).itemsize

    # Lane-dense output stores + free (TB*S, D) flatten: pad S to a multiple of 128.
    S_pad = _round_up(S, 128)

    # Generation-aware VMEM budget (v7x: 64 MiB/TC, v5e/v6e: 128 MiB).
    try:
        vmem_cap = int(pltpu.get_tpu_info().vmem_capacity_bytes)
    except Exception:  # conservative fallback if the query is unavailable
        vmem_cap = 64 << 20
    vmem_usable = (vmem_cap * 3) // 4

    weight_bytes = 2 * D * D * mm_bytes + D * 4
    # Live bytes per batch row per grid step: double-buffered rep/q/out tiles
    # plus the f32 `h` and ew_dtype `x` intermediates (the old estimate missed these).
    per_row = (S_pad * D * (2 * mm_bytes + 4 + ew_bytes)
               + 2 * D * mm_bytes + 5 * S_pad * 4)
    act_budget = max(vmem_usable - 2 * weight_bytes - (8 << 20), per_row)

    # >= 2 grid steps when B allows, so the "parallel" batch axis can shard
    # across v7x's two TensorCores (and keeps the pipeline double-buffered).
    min_steps = 2 if B >= 16 else 1
    TB = _pick_batch_tile(B, per_row, act_budget, min_steps)

    B_pad = _round_up(B, TB)
    grid = (B_pad // TB,)

    # Cast once in the wrapper (not per grid step inside the kernel), then pad.
    rep_c = rep_out.astype(mm_dtype)
    q_c = query_pool.astype(mm_dtype)
    wh_c = W_h.astype(mm_dtype)
    we_c = W_e.astype(mm_dtype)
    wms_c = w_ms.astype(f32)
    if S_pad != S or B_pad != B:
        rep_c = jnp.pad(rep_c, ((0, B_pad - B), (0, S_pad - S), (0, 0)))
    if B_pad != B:
        q_c = jnp.pad(q_c, ((0, B_pad - B), (0, 0)))

    vmem_limit = int(min(max(TB * per_row + 2 * weight_bytes + (8 << 20), 32 << 20),
                         vmem_usable))

    cost = pl.CostEstimate(
        flops=2 * B_pad * S_pad * D * D + 2 * B_pad * D * D + 2 * B_pad * S_pad * D,
        transcendentals=B_pad * S_pad * D + B_pad * S_pad,  # tanh + exp
        bytes_accessed=((B_pad * S_pad * D + B_pad * D) * mm_bytes
                        + 2 * D * D * mm_bytes + D * 4 + B_pad * S_pad * 4),
    )

    out = pl.pallas_call(
        functools.partial(badanau_attn_kernel, valid_s=S, ew_dtype=ew_dtype),
        out_shape=jax.ShapeDtypeStruct((B_pad, S_pad), f32),
        grid_spec=pltpu.PrefetchScalarGridSpec(
            num_scalar_prefetch=0,
            grid=grid,
            in_specs=[
                pl.BlockSpec((TB, S_pad, D), lambda b: (b, 0, 0)),  # rep_out tile
                pl.BlockSpec((TB, D),        lambda b: (b, 0)),     # query_pool tile
                pl.BlockSpec((D, D),         lambda b: (0, 0)),     # W_h (VMEM-resident)
                pl.BlockSpec((D, D),         lambda b: (0, 0)),     # W_e (VMEM-resident)
                pl.BlockSpec((1, D),         lambda b: (0, 0)),     # w_ms (VMEM-resident)
            ],
            out_specs=pl.BlockSpec((TB, S_pad), lambda b: (b, 0)),
        ),
        compiler_params=pltpu.CompilerParams(
            dimension_semantics=("parallel",),
            vmem_limit_bytes=vmem_limit,
        ),
        cost_estimate=cost,
    )(rep_c, q_c, wh_c, we_c, wms_c)

    # TODO(synk): for very large S (one batch row's activations > v7x's 64 MiB
    # VMEM), add an S grid axis marked "arbitrary" with an online-softmax
    # accumulator instead of batch-only tiling.
    return out[:B, :S][..., None]  # (B, S, 1), matching the PyTorch module


def badanau_attn_ref(query_pool, rep_out, W_h, W_e, w_ms):
    """Pure-JAX reference mirroring the torch module."""
    h = rep_out @ W_h.T
    e = query_pool @ W_e.T
    x = jnp.tanh(h + e[:, None, :])
    score = x @ w_ms.T                                # (B, S, 1)
    return jax.nn.softmax(score, axis=1)


if __name__ == "__main__":
    hidden = 16
    D = 2 * hidden
    B, S = 2, 8

    key = jax.random.PRNGKey(0)
    k1, k2, k3, k4, k5 = jax.random.split(key, 5)

    # Deterministic synthetic parameters (shapes from the module __init__).
    W_h = jax.random.normal(k1, (D, D), dtype=jnp.float32) * 0.1   # (out, in)
    W_e = jax.random.normal(k2, (D, D), dtype=jnp.float32) * 0.1   # (out, in)
    w_ms = jax.random.normal(k3, (1, D), dtype=jnp.float32) * 0.1  # (out=1, in)

    query_pool = jax.random.normal(k4, (B, D), dtype=jnp.float32)
    rep_out = jax.random.normal(k5, (B, S, D), dtype=jnp.float32)

    out = badanau_attn(query_pool, rep_out, W_h, W_e, w_ms)
    out = jax.block_until_ready(out)

    ref = badanau_attn_ref(query_pool, rep_out, W_h, W_e, w_ms)
    assert out.shape == (B, S, 1)
    assert jnp.allclose(out, ref, atol=1e-5, rtol=1e-5), "mismatch vs reference"

    print("KERNEL_OK")
</pallas_src>

<mosaic_0001>
module attributes {stable_mosaic.version = 11 : i64} {
  func.func @badanau_attn_kernel(%arg0: i32, %arg1: memref<2x128x32xf32, #tpu.memory_space<vmem>>, %arg2: memref<2x32xf32, #tpu.memory_space<vmem>>, %arg3: memref<32x32xf32, #tpu.memory_space<vmem>>, %arg4: memref<32x32xf32, #tpu.memory_space<vmem>>, %arg5: memref<1x32xf32, #tpu.memory_space<vmem>>, %arg6: memref<2x128xf32, #tpu.memory_space<vmem>>) attributes {dimension_semantics = [#tpu.dimension_semantics<parallel>], iteration_bounds = array<i64: 1>, scalar_prefetch = 0 : i64, scratch_operands = 0 : i64, tpu.core_type = #tpu.core_type<tc>, window_params = [{transform_indices = @transform_0, window_bounds = array<i64: 2, 128, 32>}, {transform_indices = @transform_1, window_bounds = array<i64: 2, 32>}, {pipeline_mode = #tpu.pipeline_mode<synchronous>, transform_indices = @transform_2, window_bounds = array<i64: 32, 32>}, {pipeline_mode = #tpu.pipeline_mode<synchronous>, transform_indices = @transform_3, window_bounds = array<i64: 32, 32>}, {pipeline_mode = #tpu.pipeline_mode<synchronous>, transform_indices = @transform_4, window_bounds = array<i64: 1, 32>}, {transform_indices = @transform_5, window_bounds = array<i64: 2, 128>}]} {
    %c0 = arith.constant 0 : index
    %c0_0 = arith.constant 0 : index
    %c0_1 = arith.constant 0 : index
    %0 = vector.load %arg1[%c0, %c0_0, %c0_1] : memref<2x128x32xf32, #tpu.memory_space<vmem>>, vector<2x128x32xf32>
    %1 = vector.shape_cast %0 : vector<2x128x32xf32> to vector<256x32xf32>
    %c0_2 = arith.constant 0 : index
    %c0_3 = arith.constant 0 : index
    %2 = vector.load %arg2[%c0_2, %c0_3] : memref<2x32xf32, #tpu.memory_space<vmem>>, vector<2x32xf32>
    %c0_4 = arith.constant 0 : index
    %c0_5 = arith.constant 0 : index
    %3 = vector.load %arg3[%c0_4, %c0_5] : memref<32x32xf32, #tpu.memory_space<vmem>>, vector<32x32xf32>
    %c0_6 = arith.constant 0 : index
    %c0_7 = arith.constant 0 : index
    %4 = vector.load %arg4[%c0_6, %c0_7] : memref<32x32xf32, #tpu.memory_space<vmem>>, vector<32x32xf32>
    %c0_8 = arith.constant 0 : index
    %c0_9 = arith.constant 0 : index
    %5 = vector.load %arg5[%c0_8, %c0_9] : memref<1x32xf32, #tpu.memory_space<vmem>>, vector<1x32xf32>
    %cst = arith.constant dense<0.000000e+00> : vector<256x32xf32>
    %6 = tpu.matmul %1, %3, %cst {dimension_numbers = #tpu.dot_dimension_numbers<[1], [1], [0], [0], [0, 0, 1, 0], [], []>} : vector<256x32xf32>, vector<32x32xf32>, vector<256x32xf32> -> vector<256x32xf32>
    %cst_10 = arith.constant dense<0.000000e+00> : vector<2x32xf32>
    %7 = tpu.matmul %2, %4, %cst_10 {dimension_numbers = #tpu.dot_dimension_numbers<[1], [1], [0], [0], [0, 0, 1, 0], [], []>} : vector<2x32xf32>, vector<32x32xf32>, vector<2x32xf32> -> vector<2x32xf32>
    %8 = vector.shape_cast %6 : vector<256x32xf32> to vector<2x128x32xf32>
    %9 = vector.shape_cast %7 : vector<2x32xf32> to vector<2x1x32xf32>
    %10 = vector.broadcast %9 : vector<2x1x32xf32> to vector<2x128x32xf32>
    %11 = arith.addf %8, %10 : vector<2x128x32xf32>
    %12 = math.tanh %11 : vector<2x128x32xf32>
    %13 = vector.shape_cast %5 : vector<1x32xf32> to vector<1x1x32xf32>
    %14 = vector.broadcast %13 : vector<1x1x32xf32> to vector<2x128x32xf32>
    %15 = arith.mulf %12, %14 : vector<2x128x32xf32>
    %cst_11 = arith.constant dense<0.000000e+00> : vector<2x128xf32>
    %16 = vector.multi_reduction <add>, %15, %cst_11 [2] : vector<2x128x32xf32> to vector<2x128xf32>
    %17 = tpu.iota {dimensions = array<i32: 1>} : vector<2x128xi32>
    %c8_i32 = arith.constant 8 : i32
    %18 = vector.broadcast %c8_i32 : i32 to vector<2x128xi32>
    %19 = arith.cmpi slt, %17, %18 : vector<2x128xi32>
    %cst_12 = arith.constant -1.000000e+30 : f32
    %20 = vector.broadcast %cst_12 : f32 to vector<2x128xf32>
    %21 = arith.select %19, %16, %20 : vector<2x128xi1>, vector<2x128xf32>
    %cst_13 = arith.constant dense<0xFF800000> : vector<2xf32>
    %22 = vector.multi_reduction <maximumf>, %21, %cst_13 [1] : vector<2x128xf32> to vector<2xf32>
    %23 = vector.shape_cast %22 : vector<2xf32> to vector<2x1xf32>
    %24 = vector.broadcast %23 : vector<2x1xf32> to vector<2x128xf32>
    %25 = arith.subf %21, %24 : vector<2x128xf32>
    %26 = math.exp %25 : vector<2x128xf32>
    %cst_14 = arith.constant dense<0.000000e+00> : vector<2xf32>
    %27 = vector.multi_reduction <add>, %26, %cst_14 [1] : vector<2x128xf32> to vector<2xf32>
    %28 = vector.shape_cast %27 : vector<2xf32> to vector<2x1xf32>
    %29 = tpu.reciprocal %28 : vector<2x1xf32> -> vector<2x1xf32>
    %30 = vector.broadcast %29 : vector<2x1xf32> to vector<2x128xf32>
    %31 = arith.mulf %26, %30 : vector<2x128xf32>
    %c0_15 = arith.constant 0 : index
    %c0_16 = arith.constant 0 : index
    %32 = vector.load %arg6[%c0_15, %c0_16] : memref<2x128xf32, #tpu.memory_space<vmem>>, vector<2x128xf32>
    tpu.vector_store %arg6[%c0_15, %c0_16], %31 {strides = array<i32>} : memref<2x128xf32, #tpu.memory_space<vmem>>, vector<2x128xf32>,
    return
  }
  func.func @transform_0(%arg0: i32) -> (i32, i32, i32) {
    %c0_i32 = arith.constant 0 : i32
    %c0_i32_0 = arith.constant 0 : i32
    %c0_i32_1 = arith.constant 0 : i32
    return %arg0, %c0_i32, %c0_i32_0 : i32, i32, i32
  }
  func.func @transform_1(%arg0: i32) -> (i32, i32) {
    %c0_i32 = arith.constant 0 : i32
    %c0_i32_0 = arith.constant 0 : i32
    return %arg0, %c0_i32 : i32, i32
  }
  func.func @transform_2(%arg0: i32) -> (i32, i32) {
    %c0_i32 = arith.constant 0 : i32
    %c0_i32_0 = arith.constant 0 : i32
    %c0_i32_1 = arith.constant 0 : i32
    return %c0_i32, %c0_i32_0 : i32, i32
  }
  func.func @transform_3(%arg0: i32) -> (i32, i32) {
    %c0_i32 = arith.constant 0 : i32
    %c0_i32_0 = arith.constant 0 : i32
    %c0_i32_1 = arith.constant 0 : i32
    return %c0_i32, %c0_i32_0 : i32, i32
  }
  func.func @transform_4(%arg0: i32) -> (i32, i32) {
    %c0_i32 = arith.constant 0 : i32
    %c0_i32_0 = arith.constant 0 : i32
    %c0_i32_1 = arith.constant 0 : i32
    return %c0_i32, %c0_i32_0 : i32, i32
  }
  func.func @transform_5(%arg0: i32) -> (i32, i32) {
    %c0_i32 = arith.constant 0 : i32
    %c0_i32_0 = arith.constant 0 : i32
    return %arg0, %c0_i32 : i32, i32
  }
}

</mosaic_0001>

<llo_original>
// kernel: tpu_custom_call.1
$region0: #{tpu_custom_call.1}
  #allocation0 [shape = 'u32[]', space=smem, size = 0x4, offset = 0x4, fixed_abs, tag = 'smem constant byte address 0x4 - core index']
  #allocation1 [shape = 'u32[72,128]{1,0:T(1,128)}', space=vmem, size = 0x9000, scoped, tag = 'internal scratch']
  %s0 = inlined_call_operand.vmem [shape: f32[2,128,32], index: 0, kind: input, shape index: {}]
  %s1 = inlined_call_operand.vmem [shape: f32[2,32], index: 1, kind: input, shape index: {}]
  %s2 = inlined_call_operand.vmem [shape: f32[32,32], index: 2, kind: input, shape index: {}]
  %s3 = inlined_call_operand.vmem [shape: f32[32,32], index: 3, kind: input, shape index: {}]
  %s4 = inlined_call_operand.vmem [shape: f32[1,32], index: 4, kind: input, shape index: {}]
  %s5 = inlined_call_operand.hbm [shape: f32[2,128], index: 5, kind: output, shape index: {}]
  %s6 = sld [smem:[#allocation0]]
  $region30: #{tpu_custom_call.1} parent=0
    _
  %s8 = ssub.s32 1, %s6
  %s9 = scalar_select 0, %s8, %s6
  $region1: #{tpu_custom_call.1} parent=0
    #allocation2 [shape = 'u8[1024]{0}', space=vmem, size = 0x400, scoped, tag = 'output window, operand 0, single buffered']
    #allocation3 [shape = 's32[1]{0}', space=sflag, size = 0x4, scoped, tag = 'scoped memory for tpu_custom_call.1']
    %10 = vsyncpa [#allocation3], 0
    // Predicated region
    $region2: #{tpu_custom_call.1} parent=1 // pred_check
      _
    $region3: #{tpu_custom_call.1} parent=1 // pred_check_branch
      %12 = sbr.rel (0) target = $region5
    $region4: #{tpu_custom_call.1} parent=1 // pred_region
      _
    $region5: #{tpu_custom_call.1} parent=1 // pred_fallthru
      _
    // Predicated region
    $region6: #{tpu_custom_call.1} parent=1 // pred_check
      _
    $region7: #{tpu_custom_call.1} parent=1 // pred_check_branch
      %14 = sbr.rel (0) target = $region9
    $region8: #{tpu_custom_call.1} parent=1 // pred_region
      _
    $region9: #{tpu_custom_call.1} parent=1 // pred_fallthru
      _
    // Predicated region
    $region10: #{tpu_custom_call.1} parent=1 // pred_check
      _
    $region11: #{tpu_custom_call.1} parent=1 // pred_check_branch
      %16 = sbr.rel (0) target = $region13
    $region12: #{tpu_custom_call.1} parent=1 // pred_region
      _
    $region13: #{tpu_custom_call.1} parent=1 // pred_fallthru
      _
    // Predicated region
    $region14: #{tpu_custom_call.1} parent=1 // pred_check
      _
    $region15: #{tpu_custom_call.1} parent=1 // pred_check_branch
      %18 = sbr.rel (0) target = $region17
    $region16: #{tpu_custom_call.1} parent=1 // pred_region
      _
    $region17: #{tpu_custom_call.1} parent=1 // pred_fallthru
      _
    // Predicated region
    $region18: #{tpu_custom_call.1} parent=1 // pred_check
      _
    $region19: #{tpu_custom_call.1} parent=1 // pred_check_branch
      %20 = sbr.rel (0) target = $region21
    $region20: #{tpu_custom_call.1} parent=1 // pred_region
      _
    $region21: #{tpu_custom_call.1} parent=1 // pred_fallthru
      _
    %v21 = vld [vmem:[%s0] sm:$0xff]
    %v22 = vld [vmem:[%s0 + $0x8] sm:$0xff]
    %v23 = vld [vmem:[%s0 + $0x10] sm:$0xff]
    %v24 = vld [vmem:[%s0 + $0x18] sm:$0xff]
    %v25 = vld [vmem:[%s0 + $0x20] sm:$0xff]
    %v26 = vld [vmem:[%s0 + $0x28] sm:$0xff]
    %v27 = vld [vmem:[%s0 + $0x30] sm:$0xff]
    %v28 = vld [vmem:[%s0 + $0x38] sm:$0xff]
    %v29 = vld [vmem:[%s0 + $0x40] sm:$0xff]
    %v30 = vld [vmem:[%s0 + $0x48] sm:$0xff]
    %v31 = vld [vmem:[%s0 + $0x50] sm:$0xff]
    %v32 = vld [vmem:[%s0 + $0x58] sm:$0xff]
    %v33 = vld [vmem:[%s0 + $0x60] sm:$0xff]
    %v34 = vld [vmem:[%s0 + $0x68] sm:$0xff]
    %v35 = vld [vmem:[%s0 + $0x70] sm:$0xff]
    %v36 = vld [vmem:[%s0 + $0x78] sm:$0xff]
    %v37 = vld [vmem:[%s0 + $0x80] sm:$0xff]
    %v38 = vld [vmem:[%s0 + $0x88] sm:$0xff]
    %v39 = vld [vmem:[%s0 + $0x90] sm:$0xff]
    %v40 = vld [vmem:[%s0 + $0x98] sm:$0xff]
    %v41 = vld [vmem:[%s0 + $0xa0] sm:$0xff]
    %v42 = vld [vmem:[%s0 + $0xa8] sm:$0xff]
    %v43 = vld [vmem:[%s0 + $0xb0] sm:$0xff]
    %v44 = vld [vmem:[%s0 + $0xb8] sm:$0xff]
    %v45 = vld [vmem:[%s0 + $0xc0] sm:$0xff]
    %v46 = vld [vmem:[%s0 + $0xc8] sm:$0xff]
    %v47 = vld [vmem:[%s0 + $0xd0] sm:$0xff]
    %v48 = vld [vmem:[%s0 + $0xd8] sm:$0xff]
    %v49 = vld [vmem:[%s0 + $0xe0] sm:$0xff]
    %v50 = vld [vmem:[%s0 + $0xe8] sm:$0xff]
    %v51 = vld [vmem:[%s0 + $0xf0] sm:$0xff]
    %v52 = vld [vmem:[%s0 + $0xf8] sm:$0xff]
    %v53 = vld [vmem:[%s1] sm:$0x3]
    %v54 = vld [vmem:[%s2] sm:$0xff]
    %v55 = vld [vmem:[%s2 + $0x8] sm:$0xff]
    %v56 = vld [vmem:[%s2 + $0x10] sm:$0xff]
    %v57 = vld [vmem:[%s2 + $0x18] sm:$0xff]
    %v58 = vld [vmem:[%s3] sm:$0xff]
    %v59 = vld [vmem:[%s3 + $0x8] sm:$0xff]
    %v60 = vld [vmem:[%s3 + $0x10] sm:$0xff]
    %v61 = vld [vmem:[%s3 + $0x18] sm:$0xff]
    %v62 = vld [vmem:[%s4] sm:$0x1]
    %vm63 = vcmask 261120
    %v65 = vsel %vm63, %v21, 0
    %v68 = vsel %vm63, %v22, 0
    %v71 = vsel %vm63, %v23, 0
    %v74 = vsel %vm63, %v24, 0
    %v77 = vsel %vm63, %v25, 0
    %v80 = vsel %vm63, %v26, 0
    %v83 = vsel %vm63, %v27, 0
    %v86 = vsel %vm63, %v28, 0
    %v89 = vsel %vm63, %v29, 0
    %v92 = vsel %vm63, %v30, 0
    %v95 = vsel %vm63, %v31, 0
    %v98 = vsel %vm63, %v32, 0
    %v101 = vsel %vm63, %v33, 0
    %v104 = vsel %vm63, %v34, 0
    %v107 = vsel %vm63, %v35, 0
    %v110 = vsel %vm63, %v36, 0
    %v113 = vsel %vm63, %v37, 0
    %v116 = vsel %vm63, %v38, 0
    %v119 = vsel %vm63, %v39, 0
    %v122 = vsel %vm63, %v40, 0
    %v125 = vsel %vm63, %v41, 0
    %v128 = vsel %vm63, %v42, 0
    %v131 = vsel %vm63, %v43, 0
    %v134 = vsel %vm63, %v44, 0
    %v137 = vsel %vm63, %v45, 0
    %v140 = vsel %vm63, %v46, 0
    %v143 = vsel %vm63, %v47, 0
    %v146 = vsel %vm63, %v48, 0
    %v149 = vsel %vm63, %v49, 0
    %v152 = vsel %vm63, %v50, 0
    %v155 = vsel %vm63, %v51, 0
    %v158 = vsel %vm63, %v52, 0
    %v161 = vsel %vm63, %v54, 0
    %v164 = vsel %vm63, %v55, 0
    %v167 = vsel %vm63, %v56, 0
    %v170 = vsel %vm63, %v57, 0
    %172 = vmatpush.xpose.msra.mxu0 0.0
    %173 = vmatpush.xpose.msra.mxu0 0.0
    %174 = vmatpush.xpose.msra.mxu0 0.0
    %175 = vmatpush.xpose.msra.mxu0 0.0
    %176 = vmatpush.xpose.msra.mxu0 0.0
    %177 = vmatpush.xpose.msra.mxu0 0.0
    %178 = vmatpush.xpose.msra.mxu0 0.0
    %179 = vmatpush.xpose.msra.mxu0 0.0
    %180 = vmatpush.xpose.msra.mxu0 0.0
    %181 = vmatpush.xpose.msra.mxu0 0.0
    %182 = vmatpush.xpose.msra.mxu0 0.0
    %183 = vmatpush.xpose.msra.mxu0 0.0
    %184 = vmatpush.xpose.msra.mxu0 %v170
    %185 = vmatpush.xpose.msra.mxu0 %v167
    %186 = vmatpush.xpose.msra.mxu0 %v164
    %187 = vmatpush.xpose.msra.mxu0 %v161
    %188 = vmatmul.f32.gmra.mxu0 %v65
    %v189 = vpop.f32.mrf.mxu0
    %v190 = vadd.f32 0.0, %v189
    %191 = vmatmul.f32.gmra.mxu0 %v68
    %v192 = vpop.f32.mrf.mxu0
    %v193 = vadd.f32 0.0, %v192
    %194 = vmatmul.f32.gmra.mxu0 %v71
    %v195 = vpop.f32.mrf.mxu0
    %v196 = vadd.f32 0.0, %v195
    %197 = vmatmul.f32.gmra.mxu0 %v74
    %v198 = vpop.f32.mrf.mxu0
    %v199 = vadd.f32 0.0, %v198
    %200 = vmatmul.f32.gmra.mxu0 %v77
    %v201 = vpop.f32.mrf.mxu0
    %v202 = vadd.f32 0.0, %v201
    %203 = vmatmul.f32.gmra.mxu0 %v80
    %v204 = vpop.f32.mrf.mxu0
    %v205 = vadd.f32 0.0, %v204
    %206 = vmatmul.f32.gmra.mxu0 %v83
    %v207 = vpop.f32.mrf.mxu0
    %v208 = vadd.f32 0.0, %v207
    %209 = vmatmul.f32.gmra.mxu0 %v86
    %v210 = vpop.f32.mrf.mxu0
    %v211 = vadd.f32 0.0, %v210
    %212 = vmatmul.f32.gmra.mxu0 %v89
    %v213 = vpop.f32.mrf.mxu0
    %v214 = vadd.f32 0.0, %v213
    %215 = vmatmul.f32.gmra.mxu0 %v92
    %v216 = vpop.f32.mrf.mxu0
    %v217 = vadd.f32 0.0, %v216
    %218 = vmatmul.f32.gmra.mxu0 %v95
    %v219 = vpop.f32.mrf.mxu0
    %v220 = vadd.f32 0.0, %v219
    %221 = vmatmul.f32.gmra.mxu0 %v98
    %v222 = vpop.f32.mrf.mxu0
    %v223 = vadd.f32 0.0, %v222
    %224 = vmatmul.f32.gmra.mxu0 %v101
    %v225 = vpop.f32.mrf.mxu0
    %v226 = vadd.f32 0.0, %v225
    %227 = vmatmul.f32.gmra.mxu0 %v104
    %v228 = vpop.f32.mrf.mxu0
    %v229 = vadd.f32 0.0, %v228
    %230 = vmatmul.f32.gmra.mxu0 %v107
    %v231 = vpop.f32.mrf.mxu0
    %v232 = vadd.f32 0.0, %v231
    %233 = vmatmul.f32.gmra.mxu0 %v110
    %v234 = vpop.f32.mrf.mxu0
    %v235 = vadd.f32 0.0, %v234
    %236 = vmatmul.f32.gmra.mxu0 %v113
    %v237 = vpop.f32.mrf.mxu0
    %v238 = vadd.f32 0.0, %v237
    %239 = vmatmul.f32.gmra.mxu0 %v116
    %v240 = vpop.f32.mrf.mxu0
    %v241 = vadd.f32 0.0, %v240
    %242 = vmatmul.f32.gmra.mxu0 %v119
    %v243 = vpop.f32.mrf.mxu0
    %v244 = vadd.f32 0.0, %v243
    %245 = vmatmul.f32.gmra.mxu0 %v122
    %v246 = vpop.f32.mrf.mxu0
    %v247 = vadd.f32 0.0, %v246
    %248 = vmatmul.f32.gmra.mxu0 %v125
    %v249 = vpop.f32.mrf.mxu0
    %v250 = vadd.f32 0.0, %v249
    %251 = vmatmul.f32.gmra.mxu0 %v128
    %v252 = vpop.f32.mrf.mxu0
    %v253 = vadd.f32 0.0, %v252
    %254 = vmatmul.f32.gmra.mxu0 %v131
    %v255 = vpop.f32.mrf.mxu0
    %v256 = vadd.f32 0.0, %v255
    %257 = vmatmul.f32.gmra.mxu0 %v134
    %v258 = vpop.f32.mrf.mxu0
    %v259 = vadd.f32 0.0, %v258
    %260 = vmatmul.f32.gmra.mxu0 %v137
    %v261 = vpop.f32.mrf.mxu0
    %v262 = vadd.f32 0.0, %v261
    %263 = vmatmul.f32.gmra.mxu0 %v140
    %v264 = vpop.f32.mrf.mxu0
    %v265 = vadd.f32 0.0, %v264
    %266 = vmatmul.f32.gmra.mxu0 %v143
    %v267 = vpop.f32.mrf.mxu0
    %v268 = vadd.f32 0.0, %v267
    %269 = vmatmul.f32.gmra.mxu0 %v146
    %v270 = vpop.f32.mrf.mxu0
    %v271 = vadd.f32 0.0, %v270
    %272 = vmatmul.f32.gmra.mxu0 %v149
    %v273 = vpop.f32.mrf.mxu0
    %v274 = vadd.f32 0.0, %v273
    %275 = vmatmul.f32.gmra.mxu0 %v152
    %v276 = vpop.f32.mrf.mxu0
    %v277 = vadd.f32 0.0, %v276
    %278 = vmatmul.f32.gmra.mxu0 %v155
    %v279 = vpop.f32.mrf.mxu0
    %v280 = vadd.f32 0.0, %v279
    %281 = vmatmul.f32.gmra.mxu0 %v158
    %v282 = vpop.f32.mrf.mxu0
    %v283 = vadd.f32 0.0, %v282
    %284 = vdwg.mxu0
    %v286 = vsel %vm63, %v53, 0
    %v289 = vsel %vm63, %v58, 0
    %v292 = vsel %vm63, %v59, 0
    %v295 = vsel %vm63, %v60, 0
    %v298 = vsel %vm63, %v61, 0
    %300 = vmatpush.xpose.msra.mxu0 0.0
    %301 = vmatpush.xpose.msra.mxu0 0.0
    %302 = vmatpush.xpose.msra.mxu0 0.0
    %303 = vmatpush.xpose.msra.mxu0 0.0
    %304 = vmatpush.xpose.msra.mxu0 0.0
    %305 = vmatpush.xpose.msra.mxu0 0.0
    %306 = vmatpush.xpose.msra.mxu0 0.0
    %307 = vmatpush.xpose.msra.mxu0 0.0
    %308 = vmatpush.xpose.msra.mxu0 0.0
    %309 = vmatpush.xpose.msra.mxu0 0.0
    %310 = vmatpush.xpose.msra.mxu0 0.0
    %311 = vmatpush.xpose.msra.mxu0 0.0
    %312 = vmatpush.xpose.msra.mxu0 %v298
    %313 = vmatpush.xpose.msra.mxu0 %v295
    %314 = vmatpush.xpose.msra.mxu0 %v292
    %315 = vmatpush.xpose.msra.mxu0 %v289
    %316 = vmatmul.f32.gmra.mxu0 %v286
    %v317 = vpop.f32.mrf.mxu0
    %v318 = vadd.f32 0.0, %v317
    %319 = vdwg.mxu0
    %v321 = vrot.slane %v318, 1
    %v322 = vperm.slane %v318, 0
    %v323 = vperm.slane %v321, 0
    %v326 = vadd.f32 %v190, %v322
    %v327 = vadd.f32 %v193, %v322
    %v328 = vadd.f32 %v196, %v322
    %v329 = vadd.f32 %v199, %v322
    %v330 = vadd.f32 %v202, %v322
    %v331 = vadd.f32 %v205, %v322
    %v332 = vadd.f32 %v208, %v322
    %v333 = vadd.f32 %v211, %v322
    %v334 = vadd.f32 %v214, %v322
    %v335 = vadd.f32 %v217, %v322
    %v336 = vadd.f32 %v220, %v322
    %v337 = vadd.f32 %v223, %v322
    %v338 = vadd.f32 %v226, %v322
    %v339 = vadd.f32 %v229, %v322
    %v340 = vadd.f32 %v232, %v322
    %v341 = vadd.f32 %v235, %v322
    %v342 = vadd.f32 %v238, %v323
    %v343 = vadd.f32 %v241, %v323
    %v344 = vadd.f32 %v244, %v323
    %v345 = vadd.f32 %v247, %v323
    %v346 = vadd.f32 %v250, %v323
    %v347 = vadd.f32 %v253, %v323
    %v348 = vadd.f32 %v256, %v323
    %v349 = vadd.f32 %v259, %v323
    %v350 = vadd.f32 %v262, %v323
    %v351 = vadd.f32 %v265, %v323
    %v352 = vadd.f32 %v268, %v323
    %v353 = vadd.f32 %v271, %v323
    %v354 = vadd.f32 %v274, %v323
    %v355 = vadd.f32 %v277, %v323
    %v356 = vadd.f32 %v280, %v323
    %v357 = vadd.f32 %v283, %v323
    %v358 = vtanh.pop %v326
    %v359 = vtanh.pop %v327
    %v360 = vtanh.pop %v328
    %v361 = vtanh.pop %v329
    %v362 = vtanh.pop %v330
    %v363 = vtanh.pop %v331
    %v364 = vtanh.pop %v332
    %v365 = vtanh.pop %v333
    %v366 = vtanh.pop %v334
    %v367 = vtanh.pop %v335
    %v368 = vtanh.pop %v336
    %v369 = vtanh.pop %v337
    %v370 = vtanh.pop %v338
    %v371 = vtanh.pop %v339
    %v372 = vtanh.pop %v340
    %v373 = vtanh.pop %v341
    %v374 = vtanh.pop %v342
    %v375 = vtanh.pop %v343
    %v376 = vtanh.pop %v344
    %v377 = vtanh.pop %v345
    %v378 = vtanh.pop %v346
    %v379 = vtanh.pop %v347
    %v380 = vtanh.pop %v348
    %v381 = vtanh.pop %v349
    %v382 = vtanh.pop %v350
    %v383 = vtanh.pop %v351
    %v384 = vtanh.pop %v352
    %v385 = vtanh.pop %v353
    %v386 = vtanh.pop %v354
    %v387 = vtanh.pop %v355
    %v388 = vtanh.pop %v356
    %v389 = vtanh.pop %v357
    %v391 = vperm.slane %v62, 0
    %v393 = vmul.f32 %v358, %v391
    %v394 = vmul.f32 %v359, %v391
    %v395 = vmul.f32 %v360, %v391
    %v396 = vmul.f32 %v361, %v391
    %v397 = vmul.f32 %v362, %v391
    %v398 = vmul.f32 %v363, %v391
    %v399 = vmul.f32 %v364, %v391
    %v400 = vmul.f32 %v365, %v391
    %v401 = vmul.f32 %v366, %v391
    %v402 = vmul.f32 %v367, %v391
    %v403 = vmul.f32 %v368, %v391
    %v404 = vmul.f32 %v369, %v391
    %v405 = vmul.f32 %v370, %v391
    %v406 = vmul.f32 %v371, %v391
    %v407 = vmul.f32 %v372, %v391
    %v408 = vmul.f32 %v373, %v391
    %v409 = vmul.f32 %v374, %v391
    %v410 = vmul.f32 %v375, %v391
    %v411 = vmul.f32 %v376, %v391
    %v412 = vmul.f32 %v377, %v391
    %v413 = vmul.f32 %v378, %v391
    %v414 = vmul.f32 %v379, %v391
    %v415 = vmul.f32 %v380, %v391
    %v416 = vmul.f32 %v381, %v391
    %v417 = vmul.f32 %v382, %v391
    %v418 = vmul.f32 %v383, %v391
    %v419 = vmul.f32 %v384, %v391
    %v420 = vmul.f32 %v385, %v391
    %v421 = vmul.f32 %v386, %v391
    %v422 = vmul.f32 %v387, %v391
    %v423 = vmul.f32 %v388, %v391
    %v424 = vmul.f32 %v389, %v391
    %v425 = vsel %vm63, %v393, 0.0
    %426 = vadd.xlane.f32.xlu0 %v425
    %v427 = vpop.xlane.xlu0 %426
    %v428 = vsel %vm63, %v394, 0.0
    %429 = vadd.xlane.f32.xlu0 %v428
    %v430 = vpop.xlane.xlu0 %429
    %v431 = vsel %vm63, %v395, 0.0
    %432 = vadd.xlane.f32.xlu0 %v431
    %v433 = vpop.xlane.xlu0 %432
    %v434 = vsel %vm63, %v396, 0.0
    %435 = vadd.xlane.f32.xlu0 %v434
    %v436 = vpop.xlane.xlu0 %435
    %v437 = vsel %vm63, %v397, 0.0
    %438 = vadd.xlane.f32.xlu0 %v437
    %v439 = vpop.xlane.xlu0 %438
    %v440 = vsel %vm63, %v398, 0.0
    %441 = vadd.xlane.f32.xlu0 %v440
    %v442 = vpop.xlane.xlu0 %441
    %v443 = vsel %vm63, %v399, 0.0
    %444 = vadd.xlane.f32.xlu0 %v443
    %v445 = vpop.xlane.xlu0 %444
    %v446 = vsel %vm63, %v400, 0.0
    %447 = vadd.xlane.f32.xlu0 %v446
    %v448 = vpop.xlane.xlu0 %447
    %v449 = vsel %vm63, %v401, 0.0
    %450 = vadd.xlane.f32.xlu0 %v449
    %v451 = vpop.xlane.xlu0 %450
    %v452 = vsel %vm63, %v402, 0.0
    %453 = vadd.xlane.f32.xlu0 %v452
    %v454 = vpop.xlane.xlu0 %453
    %v455 = vsel %vm63, %v403, 0.0
    %456 = vadd.xlane.f32.xlu0 %v455
    %v457 = vpop.xlane.xlu0 %456
    %v458 = vsel %vm63, %v404, 0.0
    %459 = vadd.xlane.f32.xlu0 %v458
    %v460 = vpop.xlane.xlu0 %459
    %v461 = vsel %vm63, %v405, 0.0
    %462 = vadd.xlane.f32.xlu0 %v461
    %v463 = vpop.xlane.xlu0 %462
    %v464 = vsel %vm63, %v406, 0.0
    %465 = vadd.xlane.f32.xlu0 %v464
    %v466 = vpop.xlane.xlu0 %465
    %v467 = vsel %vm63, %v407, 0.0
    %468 = vadd.xlane.f32.xlu0 %v467
    %v469 = vpop.xlane.xlu0 %468
    %v470 = vsel %vm63, %v408, 0.0
    %471 = vadd.xlane.f32.xlu0 %v470
    %v472 = vpop.xlane.xlu0 %471
    %v473 = vsel %vm63, %v409, 0.0
    %474 = vadd.xlane.f32.xlu0 %v473
    %v475 = vpop.xlane.xlu0 %474
    %v476 = vsel %vm63, %v410, 0.0
    %477 = vadd.xlane.f32.xlu0 %v476
    %v478 = vpop.xlane.xlu0 %477
    %v479 = vsel %vm63, %v411, 0.0
    %480 = vadd.xlane.f32.xlu0 %v479
    %v481 = vpop.xlane.xlu0 %480
    %v482 = vsel %vm63, %v412, 0.0
    %483 = vadd.xlane.f32.xlu0 %v482
    %v484 = vpop.xlane.xlu0 %483
    %v485 = vsel %vm63, %v413, 0.0
    %486 = vadd.xlane.f32.xlu0 %v485
    %v487 = vpop.xlane.xlu0 %486
    %v488 = vsel %vm63, %v414, 0.0
    %489 = vadd.xlane.f32.xlu0 %v488
    %v490 = vpop.xlane.xlu0 %489
    %v491 = vsel %vm63, %v415, 0.0
    %492 = vadd.xlane.f32.xlu0 %v491
    %v493 = vpop.xlane.xlu0 %492
    %v494 = vsel %vm63, %v416, 0.0
    %495 = vadd.xlane.f32.xlu0 %v494
    %v496 = vpop.xlane.xlu0 %495
    %v497 = vsel %vm63, %v417, 0.0
    %498 = vadd.xlane.f32.xlu0 %v497
    %v499 = vpop.xlane.xlu0 %498
    %v500 = vsel %vm63, %v418, 0.0
    %501 = vadd.xlane.f32.xlu0 %v500
    %v502 = vpop.xlane.xlu0 %501
    %v503 = vsel %vm63, %v419, 0.0
    %504 = vadd.xlane.f32.xlu0 %v503
    %v505 = vpop.xlane.xlu0 %504
    %v506 = vsel %vm63, %v420, 0.0
    %507 = vadd.xlane.f32.xlu0 %v506
    %v508 = vpop.xlane.xlu0 %507
    %v509 = vsel %vm63, %v421, 0.0
    %510 = vadd.xlane.f32.xlu0 %v509
    %v511 = vpop.xlane.xlu0 %510
    %v512 = vsel %vm63, %v422, 0.0
    %513 = vadd.xlane.f32.xlu0 %v512
    %v514 = vpop.xlane.xlu0 %513
    %v515 = vsel %vm63, %v423, 0.0
    %516 = vadd.xlane.f32.xlu0 %v515
    %v517 = vpop.xlane.xlu0 %516
    %v518 = vsel %vm63, %v424, 0.0
    %519 = vadd.xlane.f32.xlu0 %v518
    %v520 = vpop.xlane.xlu0 %519
    %v521 = vlaneseq
    %v522 = vand.u32 %v521, 127
    %vm523 = vcmp.lt.s32.totalorder %v522, 8
    %v556 = vperm.slane %v427, %v522
    %v557 = vadd.s32 %v522, 4294967288
    %v558 = vperm.slane %v430, %v557
    %vm559 = vcmask 130112
    %v560 = vsel %vm559, %v558, %v556
    %v561 = vadd.s32 %v522, 4294967280
    %v562 = vperm.slane %v433, %v561
    %vm563 = vcmask 195712
    %v564 = vsel %vm563, %v562, %v560
    %v565 = vadd.s32 %v522, 4294967272
    %v566 = vperm.slane %v436, %v565
    %vm567 = vcmask 261312
    %v568 = vsel %vm567, %v566, %v564
    %v569 = vadd.s32 %v522, 4294967264
    %v570 = vperm.slane %v439, %v569
    %vm571 = vcmask 326912
    %v572 = vsel %vm571, %v570, %v568
    %v573 = vadd.s32 %v522, 4294967256
    %v574 = vperm.slane %v442, %v573
    %vm575 = vcmask 392512
    %v576 = vsel %vm575, %v574, %v572
    %v577 = vadd.s32 %v522, 4294967248
    %v578 = vperm.slane %v445, %v577
    %vm579 = vcmask 458112
    %v580 = vsel %vm579, %v578, %v576
    %v581 = vadd.s32 %v522, 4294967240
    %v582 = vperm.slane %v448, %v581
    %vm583 = vcmask 523712
    %v584 = vsel %vm583, %v582, %v580
    %v585 = vadd.s32 %v522, 4294967232
    %v586 = vperm.slane %v451, %v585
    %vm587 = vcmask 589312
    %v588 = vsel %vm587, %v586, %v584
    %v589 = vadd.s32 %v522, 4294967224
    %v590 = vperm.slane %v454, %v589
    %vm591 = vcmask 654912
    %v592 = vsel %vm591, %v590, %v588
    %v593 = vadd.s32 %v522, 4294967216
    %v594 = vperm.slane %v457, %v593
    %vm595 = vcmask 720512
    %v596 = vsel %vm595, %v594, %v592
    %v597 = vadd.s32 %v522, 4294967208
    %v598 = vperm.slane %v460, %v597
    %vm599 = vcmask 786112
    %v600 = vsel %vm599, %v598, %v596
    %v601 = vadd.s32 %v522, 4294967200
    %v602 = vperm.slane %v463, %v601
    %vm603 = vcmask 851712
    %v604 = vsel %vm603, %v602, %v600
    %v605 = vadd.s32 %v522, 4294967192
    %v606 = vperm.slane %v466, %v605
    %vm607 = vcmask 917312
    %v608 = vsel %vm607, %v606, %v604
    %v609 = vadd.s32 %v522, 4294967184
    %v610 = vperm.slane %v469, %v609
    %vm611 = vcmask 982912
    %v612 = vsel %vm611, %v610, %v608
    %v613 = vadd.s32 %v522, 4294967176
    %v614 = vperm.slane %v472, %v613
    %vm615 = vcmask 1048512
    %v616 = vsel %vm615, %v614, %v612
    %v617 = vperm.slane %v475, %v522
    %v618 = vperm.slane %v478, %v557
    %v619 = vsel %vm559, %v618, %v617
    %v620 = vperm.slane %v481, %v561
    %v621 = vsel %vm563, %v620, %v619
    %v622 = vperm.slane %v484, %v565
    %v623 = vsel %vm567, %v622, %v621
    %v624 = vperm.slane %v487, %v569
    %v625 = vsel %vm571, %v624, %v623
    %v626 = vperm.slane %v490, %v573
    %v627 = vsel %vm575, %v626, %v625
    %v628 = vperm.slane %v493, %v577
    %v629 = vsel %vm579, %v628, %v627
    %v630 = vperm.slane %v496, %v581
    %v631 = vsel %vm583, %v630, %v629
    %v632 = vperm.slane %v499, %v585
    %v633 = vsel %vm587, %v632, %v631
    %v634 = vperm.slane %v502, %v589
    %v635 = vsel %vm591, %v634, %v633
    %v636 = vperm.slane %v505, %v593
    %v637 = vsel %vm595, %v636, %v635
    %v638 = vperm.slane %v508, %v597
    %v639 = vsel %vm599, %v638, %v637
    %v640 = vperm.slane %v511, %v601
    %v641 = vsel %vm603, %v640, %v639
    %v642 = vperm.slane %v514, %v605
    %v643 = vsel %vm607, %v642, %v641
    %v644 = vperm.slane %v517, %v609
    %v645 = vsel %vm611, %v644, %v643
    %v646 = vperm.slane %v520, %v613
    %v647 = vsel %vm615, %v646, %v645
    %vm648 = vcmask 1041409
    %v649 = vsel %vm648, %v647, %v616
    %v651 = vsel %vm523, %v649, -1e+30
    %vm652 = vcmask 1041408
    %v653 = vsel %vm652, %v651, -inf
    %654 = vmax.xlane.f32.xlu0 %v653
    %v655 = vpop.xlane.xlu0 %654
    %v656 = vsub.f32 %v651, %v655
    %v657 = vmul.f32 %v656, 1.442695
    %v658 = vpow.pop %v657
    %v659 = vsel %vm652, %v658, 0.0
    %660 = vadd.xlane.f32.xlu0 %v659
    %v661 = vpop.xlane.xlu0 %660
    %v662 = vrcp.pop %v661
    %v663 = vmul.f32 %v661, %v662
    %v664 = vsub.f32 1.0, %v663
    %v665 = vmul.f32 %v662, %v664
    %v666 = vadd.f32 %v662, %v665
    %vm667 = vweird.f32 %v661
    %vm668 = vweird.f32 %v662
    %vm669 = vmor %vm667, %vm668
    %v670 = vsel %vm669, %v662, %v666
    %v671 = vand.u32 2147483647, %v661
    %vm672 = vcmp.eq.f32.partialorder %v671, 8.507059e+37
    %v673 = vand.u32 %v661, 2147483648
    %v674 = vor.u32 1.1754944e-38, %v673
    %v675 = vsel %vm672, %v674, %v670
    %v676 = vmul.f32 %v658, %v675
    %677 = vst [vmem:[#allocation2] sm:$0x3] %v676
    // Predicated region
    $region22: #{tpu_custom_call.1} parent=1 // pred_check
      _
    $region23: #{tpu_custom_call.1} parent=1 // pred_check_branch
      %679 = sbr.rel (0) target = $region25
    $region24: #{tpu_custom_call.1} parent=1 // pred_region
      %681 = vsyncadd [#allocation3], 0
      %s683 = sshll.u32 [#allocation2], 4
      %s684 = int_to_ptr.vmem [resolvable:$true] %s683
      %s685 = sshll.u32 %s5, 4
      %s686 = int_to_ptr.hbm [resolvable:$true] %s685
      %688 = dma.vmem_to_hbm [thread:$0]  %s684, 32, %s686, [#allocation3]
    $region25: #{tpu_custom_call.1} parent=1 // pred_fallthru
      _
    // Predicated region
    $region26: #{tpu_custom_call.1} parent=1 // pred_check
      _
    $region27: #{tpu_custom_call.1} parent=1 // pred_check_branch
      %690 = sbr.rel (0) target = $region29
    $region28: #{tpu_custom_call.1} parent=1 // pred_region
      %692 = dma.done [#allocation3], 32
    $region29: #{tpu_custom_call.1} parent=1 // pred_fallthru
      _
    %693 = vsyncpa [#allocation3], 1

</llo_original>
